<compile_context>
chip_gen: v7x
topology: tpu7x:2x2x1
jax: 0.10.0
libtpu: 0.0.40
codegen_flags: <defaults>
</compile_context>

<pallas_src>
import functools

import jax
import jax.numpy as jnp
from jax.experimental import pallas as pl
from jax.experimental.pallas import tpu as pltpu


# ----------------------------------------------------------------------------- kernel
def _ms_embed_kernel(a_ref, cw_ref, b_ref, x0_ref, x1_ref, x2_ref, o_ref):
    # Mixing weights are already softmaxed in the wrapper (SMEM scalars, f32).
    w0, w1, w2 = a_ref[0], a_ref[1], a_ref[2]
    mixed = (w0 * x0_ref[...].astype(jnp.float32)
             + w1 * x1_ref[...].astype(jnp.float32)
             + w2 * x2_ref[...].astype(jnp.float32))          # (tn, C_in, tl) f32, VPU

    cw = cw_ref[...]                                           # (C_out, C_in) f32, resident
    bias = b_ref[...]                                          # (C_out, 1) f32, resident
    c_in = mixed.shape[1]

    if c_in > 32:
        # Large channel counts: contract on the MXU instead of a huge unrolled VALU loop.
        acc = jnp.einsum("oc,ncl->nol", cw, mixed,
                         preferred_element_type=jnp.float32) + bias
    else:
        # Pointwise (k=1) conv as C_in broadcast-FMAs on the VPU; bias folded into init.
        acc = bias + cw[:, 0:1] * mixed[:, 0:1, :]             # (tn, C_out, tl)
        for c in range(1, c_in):                               # static unroll, C_in tiny
            acc = acc + cw[:, c:c + 1] * mixed[:, c:c + 1, :]

    o_ref[...] = acc.astype(o_ref.dtype)


# ------------------------------------------------------------------- wrapper-side glue
def _linear_interp_ncl(x, l_out):
    """PyTorch F.interpolate(mode='linear', align_corners=False) on (N, C, L_in).

    Integer upsample ratios (the 2x/4x this module sees) use a gather-free static
    two-tap blend + interleave; all blend arithmetic stays in f32 regardless of
    the input dtype. Non-integer ratios fall back to a gather formulation.
    """
    l_in = x.shape[-1]
    if l_in == l_out:
        return x
    xf = x.astype(jnp.float32)

    if l_out % l_in == 0:                                       # integer ratio: no gather
        r = l_out // l_in
        left = jnp.concatenate([xf[..., :1], xf[..., :-1]], axis=-1)    # x[k-1], edge-clamped
        right = jnp.concatenate([xf[..., 1:], xf[..., -1:]], axis=-1)   # x[k+1], edge-clamped
        phases = []
        for p in range(r):                                      # out[k*r + p]
            off = (p + 0.5) / r - 0.5                           # in (-0.5, 0.5), never 0
            if off < 0.0:
                frac = 1.0 + off                                # floor(src) = k-1
                phases.append((1.0 - frac) * left + frac * xf)
            else:
                frac = off                                      # floor(src) = k
                phases.append((1.0 - frac) * xf + frac * right)
        out = jnp.stack(phases, axis=-1).reshape(x.shape[:-1] + (l_out,))
        return out.astype(x.dtype)

    # General fallback (non-integer ratio): gather-based, still all-f32 math.
    scale = l_in / l_out
    j = jnp.arange(l_out, dtype=jnp.float32)
    src = jnp.clip((j + 0.5) * scale - 0.5, 0.0, l_in - 1)
    lo = jnp.floor(src).astype(jnp.int32)
    hi = jnp.minimum(lo + 1, l_in - 1)
    frac = src - lo.astype(jnp.float32)
    out = xf[..., lo] * (1.0 - frac) + xf[..., hi] * frac
    return out.astype(x.dtype)


def _vmem_capacity_bytes():
    """Physical VMEM of the current generation (128 MiB v5e/v6e, 64 MiB v7x)."""
    try:
        cap = int(pltpu.get_tpu_info().vmem_capacity_bytes)
        if cap > 0:
            return cap
    except Exception:
        pass
    return 64 * 1024 * 1024                                     # conservative (v7x-sized)


def _cdiv(a, b):
    return -(-a // b)


def _round_up(x, m):
    return _cdiv(x, m) * m


_SUBLANES = {4: 8, 2: 16, 1: 32}                                # f32 / bf16 / int8 packing


def _choose_tiles(n, l, c_in, c_out, in_dtype, out_dtype, requested_tl, vmem_budget):
    """Pick (tile_n, tile_l): big lane tiles, >=2 grid steps, within a VMEM budget."""
    in_sz = jnp.dtype(in_dtype).itemsize
    out_sz = jnp.dtype(out_dtype).itemsize
    # Double-buffered VMEM bytes per lane column per batch row, sublane-rounded
    # (the second-minor dim pads to 8 for f32 / 16 for bf16).
    col_bytes = 2 * (3 * _round_up(c_in, _SUBLANES.get(in_sz, 8)) * in_sz
                     + _round_up(c_out, _SUBLANES.get(out_sz, 8)) * out_sz)
    cap_cols = max(128, vmem_budget // col_bytes)

    tl = min(l, int(requested_tl), cap_cols)
    if tl < l:
        tl = max(128, (tl // 128) * 128)                        # partial tiles: lane-aligned

    # Batch tiling: amortize the ~0.35us/step pipeline overhead when one (C, L)
    # slab is small by DMAing several batch rows per grid step (>= ~2 MiB/step).
    tile_n = 1
    if tl == l:
        hbm_row = l * (3 * c_in * in_sz + c_out * out_sz)
        target = 2 * 1024 * 1024
        tile_n = max(1, min(n, target // max(hbm_row, 1)))
        tile_n = max(1, min(tile_n, vmem_budget // max(col_bytes * tl, 1)))

    # Megacore: keep >= 2 grid steps so both v7x TensorCores get work.
    if _cdiv(n, tile_n) * _cdiv(l, tl) < 2:
        if tile_n > 1:
            tile_n = max(1, _cdiv(n, 2))
        elif l > 128:
            tl = max(128, _round_up(_cdiv(l, 2), 128))
    return int(tile_n), int(tl)


@functools.partial(jax.jit, static_argnames=("tile_l",))
def multi_scale_embedding(x0, x1, x2, mix_weights, conv_w, conv_b, *, tile_l=65536):
    """x*: (N, C_in, L_i); conv_w: (C_out, C_in, 1); conv_b: (C_out,). Returns (N, C_out, L)."""
    n, c_in, l = x0.shape
    c_out = conv_w.shape[0]
    out_dtype = x0.dtype

    # Resize scales whose length differs (same check the PyTorch forward does).
    # TODO(synk): fusing this 2x/4x upsample into the kernel (two-tap blend + lane
    # interleave with a 1-column halo) would cut HBM traffic roughly 2x further, but
    # the lane interleave needs a relayout with no robust Mosaic lowering path here,
    # so it is kept as gather-free streaming passes in XLA.
    # TODO(synk): the original .squeeze(1) degenerate C_in == 1 path is not modeled.
    x1 = _linear_interp_ncl(x1, l).astype(out_dtype)
    x2 = _linear_interp_ncl(x2, l).astype(out_dtype)
    # NOTE: inputs are streamed in their native dtype (no forced f32 upcast) —
    # bf16 inputs halve HBM traffic; the kernel widens to f32 for the math.

    # Hoisted out of the kernel: softmax over the 3 scalar mixing weights.
    a = jax.nn.softmax(mix_weights.astype(jnp.float32))          # (3,)
    w_mat = conv_w[:, :, 0].astype(jnp.float32)                  # (C_out, C_in)
    b_col = conv_b.reshape(c_out, 1).astype(jnp.float32)         # (C_out, 1)

    vmem_cap = _vmem_capacity_bytes()
    tile_n, tl = _choose_tiles(n, l, c_in, c_out, x0.dtype, out_dtype,
                               tile_l, vmem_cap // 4)
    grid = (_cdiv(n, tile_n), _cdiv(l, tl))

    in_sz = jnp.dtype(x0.dtype).itemsize
    out_sz = jnp.dtype(out_dtype).itemsize
    cost = pl.CostEstimate(                                      # advisory; excludes the
        flops=2 * n * l * c_in * c_out + 5 * n * l * c_in,       # XLA interp passes
        transcendentals=0,
        bytes_accessed=n * l * (3 * c_in * in_sz + c_out * out_sz)
        + 4 * (c_out * c_in + c_out + 3),
    )

    out = pl.pallas_call(
        _ms_embed_kernel,
        out_shape=jax.ShapeDtypeStruct((n, c_out, l), out_dtype),
        grid_spec=pltpu.PrefetchScalarGridSpec(
            num_scalar_prefetch=0,
            grid=grid,
            in_specs=[
                pl.BlockSpec(memory_space=pltpu.MemorySpace.SMEM),           # softmaxed mix (3,)
                pl.BlockSpec((c_out, c_in), lambda b, t: (0, 0)),            # 1x1 conv weight
                pl.BlockSpec((c_out, 1), lambda b, t: (0, 0)),               # bias column
                pl.BlockSpec((tile_n, c_in, tl), lambda b, t: (b, 0, t)),    # x0 (NCL, L on lanes)
                pl.BlockSpec((tile_n, c_in, tl), lambda b, t: (b, 0, t)),    # x1 (resized)
                pl.BlockSpec((tile_n, c_in, tl), lambda b, t: (b, 0, t)),    # x2 (resized)
            ],
            out_specs=pl.BlockSpec((tile_n, c_out, tl), lambda b, t: (b, 0, t)),
        ),
        compiler_params=pltpu.CompilerParams(
            dimension_semantics=("parallel", "parallel"),
            vmem_limit_bytes=max(32 * 1024 * 1024,
                                 min(vmem_cap * 3 // 4, 96 * 1024 * 1024)),
        ),
        cost_estimate=cost,
    )(a, w_mat, b_col, x0, x1, x2)
    return out


# ---------------------------------------------------------------------------- reference
def _interp_ref(x, l_out):
    """Independent gather-based interpolation (checks the gather-free fast path)."""
    l_in = x.shape[-1]
    xf = x.astype(jnp.float32)
    if l_in == l_out:
        return xf
    scale = l_in / l_out
    j = jnp.arange(l_out, dtype=jnp.float32)
    src = jnp.clip((j + 0.5) * scale - 0.5, 0.0, l_in - 1)
    lo = jnp.floor(src).astype(jnp.int32)
    hi = jnp.minimum(lo + 1, l_in - 1)
    frac = src - lo.astype(jnp.float32)
    return xf[..., lo] * (1.0 - frac) + xf[..., hi] * frac


def _reference(x0, x1, x2, mix_weights, conv_w, conv_b):
    l = x0.shape[-1]
    u1 = _interp_ref(x1, l)
    u2 = _interp_ref(x2, l)
    w = jax.nn.softmax(mix_weights.astype(jnp.float32), axis=0)
    mixed = w[0] * x0.astype(jnp.float32) + w[1] * u1 + w[2] * u2
    return (jnp.einsum("oc,ncl->nol", conv_w[:, :, 0].astype(jnp.float32), mixed)
            + conv_b.astype(jnp.float32)[None, :, None])


if __name__ == "__main__":
    key = jax.random.PRNGKey(0)
    ks = jax.random.split(key, 11)

    # Case 1: small shapes matching the module's forward (x1 is 2x-interpolated).
    N, C_IN, C_OUT, L = 2, 4, 8, 64
    x0 = jax.random.normal(ks[0], (N, C_IN, L), dtype=jnp.float32)
    x1 = jax.random.normal(ks[1], (N, C_IN, L // 2), dtype=jnp.float32)
    x2 = jax.random.normal(ks[2], (N, C_IN, L), dtype=jnp.float32)

    mix_weights = jnp.ones((3,), dtype=jnp.float32)              # nn.Parameter(torch.ones(3))
    conv_w = jax.random.normal(ks[3], (C_OUT, C_IN, 1), dtype=jnp.float32) * 0.1
    conv_b = jax.random.normal(ks[4], (C_OUT,), dtype=jnp.float32) * 0.1

    out = jax.block_until_ready(
        multi_scale_embedding(x0, x1, x2, mix_weights, conv_w, conv_b))
    ref = _reference(x0, x1, x2, mix_weights, conv_w, conv_b)
    assert out.shape == (N, C_OUT, L), out.shape
    assert jnp.allclose(out, ref, rtol=1e-5, atol=1e-5), "mismatch vs reference (case 1)"

    # Case 2: multi-tile grid + ragged last L-tile (L=320, tile_l=128), 2x and 4x scales.
    L2 = 320
    y0 = jax.random.normal(ks[5], (N, C_IN, L2), dtype=jnp.float32)
    y1 = jax.random.normal(ks[6], (N, C_IN, L2 // 2), dtype=jnp.float32)
    y2 = jax.random.normal(ks[7], (N, C_IN, L2 // 4), dtype=jnp.float32)
    out2 = jax.block_until_ready(
        multi_scale_embedding(y0, y1, y2, mix_weights, conv_w, conv_b, tile_l=128))
    ref2 = _reference(y0, y1, y2, mix_weights, conv_w, conv_b)
    assert out2.shape == (N, C_OUT, L2), out2.shape
    assert jnp.allclose(out2, ref2, rtol=1e-5, atol=1e-5), "mismatch vs reference (case 2)"

    # Case 3: bf16 streaming across HBM (f32 math inside the kernel), loose tolerance.
    L3 = 256
    z0 = jax.random.normal(ks[8], (N, C_IN, L3), dtype=jnp.float32).astype(jnp.bfloat16)
    z1 = jax.random.normal(ks[9], (N, C_IN, L3 // 2), dtype=jnp.float32).astype(jnp.bfloat16)
    z2 = jax.random.normal(ks[10], (N, C_IN, L3 // 4), dtype=jnp.float32).astype(jnp.bfloat16)
    out3 = jax.block_until_ready(
        multi_scale_embedding(z0, z1, z2, mix_weights, conv_w, conv_b))
    ref3 = _reference(z0.astype(jnp.float32), z1.astype(jnp.float32),
                      z2.astype(jnp.float32), mix_weights, conv_w, conv_b)
    assert out3.shape == (N, C_OUT, L3), out3.shape
    assert out3.dtype == jnp.bfloat16, out3.dtype
    assert jnp.allclose(out3.astype(jnp.float32), ref3, rtol=5e-2, atol=5e-2), \
        "mismatch vs reference (case 3, bf16)"

    print("KERNEL_OK")
</pallas_src>

<mosaic_0001>
module attributes {stable_mosaic.version = 11 : i64} {
  func.func @_ms_embed_kernel(%arg0: i32, %arg1: i32, %arg2: memref<3xf32, #tpu.memory_space<smem>>, %arg3: memref<8x4xf32, #tpu.memory_space<vmem>>, %arg4: memref<8x1xf32, #tpu.memory_space<vmem>>, %arg5: memref<1x4x64xf32, #tpu.memory_space<vmem>>, %arg6: memref<1x4x64xf32, #tpu.memory_space<vmem>>, %arg7: memref<1x4x64xf32, #tpu.memory_space<vmem>>, %arg8: memref<1x8x64xf32, #tpu.memory_space<vmem>>) attributes {dimension_semantics = [#tpu.dimension_semantics<parallel>, #tpu.dimension_semantics<parallel>], iteration_bounds = array<i64: 2, 1>, scalar_prefetch = 0 : i64, scratch_operands = 0 : i64, tpu.core_type = #tpu.core_type<tc>, window_params = [{transform_indices = @transform_0, window_bounds = array<i64: 3>}, {pipeline_mode = #tpu.pipeline_mode<synchronous>, transform_indices = @transform_1, window_bounds = array<i64: 8, 4>}, {pipeline_mode = #tpu.pipeline_mode<synchronous>, transform_indices = @transform_2, window_bounds = array<i64: 8, 1>}, {transform_indices = @transform_3, window_bounds = array<i64: 1, 4, 64>}, {transform_indices = @transform_4, window_bounds = array<i64: 1, 4, 64>}, {transform_indices = @transform_5, window_bounds = array<i64: 1, 4, 64>}, {transform_indices = @transform_6, window_bounds = array<i64: 1, 8, 64>}]} {
    %c0 = arith.constant 0 : index
    %0 = memref.load %arg2[%c0] : memref<3xf32, #tpu.memory_space<smem>>
    %c1 = arith.constant 1 : index
    %1 = memref.load %arg2[%c1] : memref<3xf32, #tpu.memory_space<smem>>
    %c2 = arith.constant 2 : index
    %2 = memref.load %arg2[%c2] : memref<3xf32, #tpu.memory_space<smem>>
    %c0_0 = arith.constant 0 : index
    %c0_1 = arith.constant 0 : index
    %c0_2 = arith.constant 0 : index
    %3 = vector.load %arg5[%c0_0, %c0_1, %c0_2] : memref<1x4x64xf32, #tpu.memory_space<vmem>>, vector<1x4x64xf32>
    %4 = vector.broadcast %0 : f32 to vector<1x4x64xf32>
    %5 = arith.mulf %4, %3 : vector<1x4x64xf32>
    %c0_3 = arith.constant 0 : index
    %c0_4 = arith.constant 0 : index
    %c0_5 = arith.constant 0 : index
    %6 = vector.load %arg6[%c0_3, %c0_4, %c0_5] : memref<1x4x64xf32, #tpu.memory_space<vmem>>, vector<1x4x64xf32>
    %7 = vector.broadcast %1 : f32 to vector<1x4x64xf32>
    %8 = arith.mulf %7, %6 : vector<1x4x64xf32>
    %9 = arith.addf %5, %8 : vector<1x4x64xf32>
    %c0_6 = arith.constant 0 : index
    %c0_7 = arith.constant 0 : index
    %c0_8 = arith.constant 0 : index
    %10 = vector.load %arg7[%c0_6, %c0_7, %c0_8] : memref<1x4x64xf32, #tpu.memory_space<vmem>>, vector<1x4x64xf32>
    %11 = vector.broadcast %2 : f32 to vector<1x4x64xf32>
    %12 = arith.mulf %11, %10 : vector<1x4x64xf32>
    %13 = arith.addf %9, %12 : vector<1x4x64xf32>
    %c0_9 = arith.constant 0 : index
    %c0_10 = arith.constant 0 : index
    %14 = vector.load %arg3[%c0_9, %c0_10] : memref<8x4xf32, #tpu.memory_space<vmem>>, vector<8x4xf32>
    %c0_11 = arith.constant 0 : index
    %c0_12 = arith.constant 0 : index
    %15 = vector.load %arg4[%c0_11, %c0_12] : memref<8x1xf32, #tpu.memory_space<vmem>>, vector<8x1xf32>
    %16 = vector.extract_strided_slice %14 {offsets = [0, 0], sizes = [8, 1], strides = [1, 1]} : vector<8x4xf32> to vector<8x1xf32>
    %17 = vector.extract_strided_slice %13 {offsets = [0, 0, 0], sizes = [1, 1, 64], strides = [1, 1, 1]} : vector<1x4x64xf32> to vector<1x1x64xf32>
    %18 = vector.shape_cast %16 : vector<8x1xf32> to vector<1x8x1xf32>
    %19 = vector.broadcast %18 : vector<1x8x1xf32> to vector<1x8x64xf32>
    %20 = vector.broadcast %17 : vector<1x1x64xf32> to vector<1x8x64xf32>
    %21 = arith.mulf %19, %20 : vector<1x8x64xf32>
    %22 = vector.shape_cast %15 : vector<8x1xf32> to vector<1x8x1xf32>
    %23 = vector.broadcast %22 : vector<1x8x1xf32> to vector<1x8x64xf32>
    %24 = arith.addf %23, %21 : vector<1x8x64xf32>
    %25 = vector.extract_strided_slice %14 {offsets = [0, 1], sizes = [8, 1], strides = [1, 1]} : vector<8x4xf32> to vector<8x1xf32>
    %26 = vector.extract_strided_slice %13 {offsets = [0, 1, 0], sizes = [1, 1, 64], strides = [1, 1, 1]} : vector<1x4x64xf32> to vector<1x1x64xf32>
    %27 = vector.shape_cast %25 : vector<8x1xf32> to vector<1x8x1xf32>
    %28 = vector.broadcast %27 : vector<1x8x1xf32> to vector<1x8x64xf32>
    %29 = vector.broadcast %26 : vector<1x1x64xf32> to vector<1x8x64xf32>
    %30 = arith.mulf %28, %29 : vector<1x8x64xf32>
    %31 = arith.addf %24, %30 : vector<1x8x64xf32>
    %32 = vector.extract_strided_slice %14 {offsets = [0, 2], sizes = [8, 1], strides = [1, 1]} : vector<8x4xf32> to vector<8x1xf32>
    %33 = vector.extract_strided_slice %13 {offsets = [0, 2, 0], sizes = [1, 1, 64], strides = [1, 1, 1]} : vector<1x4x64xf32> to vector<1x1x64xf32>
    %34 = vector.shape_cast %32 : vector<8x1xf32> to vector<1x8x1xf32>
    %35 = vector.broadcast %34 : vector<1x8x1xf32> to vector<1x8x64xf32>
    %36 = vector.broadcast %33 : vector<1x1x64xf32> to vector<1x8x64xf32>
    %37 = arith.mulf %35, %36 : vector<1x8x64xf32>
    %38 = arith.addf %31, %37 : vector<1x8x64xf32>
    %39 = vector.extract_strided_slice %14 {offsets = [0, 3], sizes = [8, 1], strides = [1, 1]} : vector<8x4xf32> to vector<8x1xf32>
    %40 = vector.extract_strided_slice %13 {offsets = [0, 3, 0], sizes = [1, 1, 64], strides = [1, 1, 1]} : vector<1x4x64xf32> to vector<1x1x64xf32>
    %41 = vector.shape_cast %39 : vector<8x1xf32> to vector<1x8x1xf32>
    %42 = vector.broadcast %41 : vector<1x8x1xf32> to vector<1x8x64xf32>
    %43 = vector.broadcast %40 : vector<1x1x64xf32> to vector<1x8x64xf32>
    %44 = arith.mulf %42, %43 : vector<1x8x64xf32>
    %45 = arith.addf %38, %44 : vector<1x8x64xf32>
    %c0_13 = arith.constant 0 : index
    %c0_14 = arith.constant 0 : index
    %c0_15 = arith.constant 0 : index
    %46 = vector.load %arg8[%c0_13, %c0_14, %c0_15] : memref<1x8x64xf32, #tpu.memory_space<vmem>>, vector<1x8x64xf32>
    tpu.vector_store %arg8[%c0_13, %c0_14, %c0_15], %45 {strides = array<i32>} : memref<1x8x64xf32, #tpu.memory_space<vmem>>, vector<1x8x64xf32>,
    return
  }
  func.func @transform_0(%arg0: i32, %arg1: i32) -> i32 {
    %c0_i32 = arith.constant 0 : i32
    %c0_i32_0 = arith.constant 0 : i32
    return %c0_i32 : i32
  }
  func.func @transform_1(%arg0: i32, %arg1: i32) -> (i32, i32) {
    %c0_i32 = arith.constant 0 : i32
    %c0_i32_0 = arith.constant 0 : i32
    %c0_i32_1 = arith.constant 0 : i32
    return %c0_i32, %c0_i32_0 : i32, i32
  }
  func.func @transform_2(%arg0: i32, %arg1: i32) -> (i32, i32) {
    %c0_i32 = arith.constant 0 : i32
    %c0_i32_0 = arith.constant 0 : i32
    %c0_i32_1 = arith.constant 0 : i32
    return %c0_i32, %c0_i32_0 : i32, i32
  }
  func.func @transform_3(%arg0: i32, %arg1: i32) -> (i32, i32, i32) {
    %c0_i32 = arith.constant 0 : i32
    %c0_i32_0 = arith.constant 0 : i32
    return %arg0, %c0_i32, %arg1 : i32, i32, i32
  }
  func.func @transform_4(%arg0: i32, %arg1: i32) -> (i32, i32, i32) {
    %c0_i32 = arith.constant 0 : i32
    %c0_i32_0 = arith.constant 0 : i32
    return %arg0, %c0_i32, %arg1 : i32, i32, i32
  }
  func.func @transform_5(%arg0: i32, %arg1: i32) -> (i32, i32, i32) {
    %c0_i32 = arith.constant 0 : i32
    %c0_i32_0 = arith.constant 0 : i32
    return %arg0, %c0_i32, %arg1 : i32, i32, i32
  }
  func.func @transform_6(%arg0: i32, %arg1: i32) -> (i32, i32, i32) {
    %c0_i32 = arith.constant 0 : i32
    %c0_i32_0 = arith.constant 0 : i32
    return %arg0, %c0_i32, %arg1 : i32, i32, i32
  }
}

</mosaic_0001>

<llo_original>
// kernel: multi_scale_embedding.1
$region0: #{multi_scale_embedding.1}
  #allocation0 [shape = 'u32[]', space=smem, size = 0x4, offset = 0x4, fixed_abs, tag = 'smem constant byte address 0x4 - core index']
  #allocation1 [shape = 'u32[144,128]{1,0:T(1,128)}', space=vmem, size = 0x12000, scoped, tag = 'internal scratch']
  %s0 = inlined_call_operand.vmem [shape: f32[3], index: 0, kind: input, shape index: {}]
  %s1 = inlined_call_operand.vmem [shape: f32[8,4], index: 1, kind: input, shape index: {}]
  %s2 = inlined_call_operand.vmem [shape: f32[8,1], index: 2, kind: input, shape index: {}]
  %s3 = inlined_call_operand.vmem [shape: f32[2,4,64], index: 3, kind: input, shape index: {}]
  %s4 = inlined_call_operand.vmem [shape: f32[2,4,64], index: 4, kind: input, shape index: {}]
  %s5 = inlined_call_operand.vmem [shape: f32[2,4,64], index: 5, kind: input, shape index: {}]
  %s6 = inlined_call_operand.hbm [shape: f32[2,8,64], index: 6, kind: output, shape index: {}]
  %s7 = sld [smem:[#allocation0]]
  $region61: #{multi_scale_embedding.1} parent=0
    _
  %s9 = ssub.s32 1, %s7
  %s10 = scalar_select 0, %s9, %s7
  $region1: #{multi_scale_embedding.1} parent=0
    #allocation2 [shape = 'u8[512]{0}', space=smem, size = 0x200, scoped, tag = 'input window, operand 0, single buffered']
    #allocation3 [shape = 's32[2]{0}', space=sflag, size = 0x8, scoped, tag = 'scoped memory for multi_scale_embedding.1']
    #allocation4 [shape = 's32[2]{0}', space=sflag, size = 0x8, scoped, tag = 'scoped memory for multi_scale_embedding.1']
    #allocation5 [shape = 'u8[8192]{0}', space=vmem, size = 0x2000, scoped, tag = 'output window, operand 0']
    %11 = vsyncpa [#allocation4], 0
    %12 = vsyncpa [#allocation3], 0
    %s13 = scalar_lea.sflag [#allocation3], 1
    %14 = vsyncpa %s13, 0
    loop: start=0, step=1, limit=4
    $region2: #{multi_scale_embedding.1} parent=1 // loop_pre_header
      _
    $region3: #{multi_scale_embedding.1} parent=1 // loop_header
      %s16 = sphi 0, %s20
      %p17 = scmp.ge.s32.totalorder %s16, 4
      %s23 = sphi 0, %s35
      %s24 = sphi 0, %s31
      %s25 = sphi 0, %s23
      %s26 = sphi 0, %s24
      %s27 = sphi 0, %s25
      %s28 = sphi 0, %s26
      %s36 = sphi 0, %s36
      %s38 = sphi 0, %s36
      %s39 = sphi 0, %s38
      %s53 = sphi 0, %s39
      %s57 = sphi 0, %s57
      %s59 = sphi 0, %s57
      %s60 = sphi 0, %s59
      %s74 = sphi 0, %s60
      %s78 = sphi 0, %s78
      %s80 = sphi 0, %s78
      %s81 = sphi 0, %s80
      %s95 = sphi 0, %s81
      %s103 = sphi 0, %s105
      %s106 = sphi 0, %s103
      %s107 = sphi 0, %s106
      %s123 = sphi 0, %s107
      %s131 = sphi 0, %s133
      %s134 = sphi 0, %s131
      %s135 = sphi 0, %s134
      %s151 = sphi 0, %s135
      %s159 = sphi 0, %s161
      %s162 = sphi 0, %s159
      %s163 = sphi 0, %s162
      %s179 = sphi 0, %s163
      %s187 = sphi 0, %s189
      %s190 = sphi 0, %s187
      %s191 = sphi 0, %s190
      %s207 = sphi 0, %s191
    $region4: #{multi_scale_embedding.1} parent=1 // loop_header_branch
      %19 = sbr.rel (%p17) target = $region8
    $region5: #{multi_scale_embedding.1} parent=1 // loop_body
      %s21 = ssub.s32 %s16, 1
      %s22 = ssub.s32 %s16, 2
      %s29 = sadd.s32 1, %s24
      %p30 = scmp.ge.s32.totalorder %s29, 1
      %s31 = scalar_select %p30, 0, %s29
      %s32 = sadd.s32 1, %s23
      %s33 = scalar_select %p30, %s32, %s23
      %p34 = scmp.ge.s32.totalorder %s33, 2
      %s35 = scalar_select %p34, 0, %s33
      %s37 = sadd.s32 %s36, 1
      %p40 = scmp.eq.s32.totalorder %s16, 1
      %p41 = scmp.ne.s32.totalorder %s36, %s38
      %p42 = scmp.eq.s32.totalorder %s16, 0
      %p43 = por %p41, %p42
      %p44 = scmp.ne.s32.totalorder %s36, %s38
      %p45 = scmp.eq.s32.totalorder %s21, 1
      %p46 = por %p44, %p45
      %p47 = scmp.ne.s32.totalorder %s38, %s39
      %p48 = scmp.eq.s32.totalorder %s21, 0
      %p49 = por %p47, %p48
      %p50 = scmp.ne.s32.totalorder %s38, %s39
      %p51 = scmp.eq.s32.totalorder %s22, 1
      %p52 = por %p50, %p51
      %p54 = scmp.ne.s32.totalorder %s39, %s53
      %p55 = scmp.eq.s32.totalorder %s22, 0
      %p56 = por %p54, %p55
      %s58 = sadd.s32 %s57, 1
      %p61 = scmp.eq.s32.totalorder %s16, 1
      %p62 = scmp.ne.s32.totalorder %s57, %s59
      %p63 = scmp.eq.s32.totalorder %s16, 0
      %p64 = por %p62, %p63
      %p65 = scmp.ne.s32.totalorder %s57, %s59
      %p66 = scmp.eq.s32.totalorder %s21, 1
      %p67 = por %p65, %p66
      %p68 = scmp.ne.s32.totalorder %s59, %s60
      %p69 = scmp.eq.s32.totalorder %s21, 0
      %p70 = por %p68, %p69
      %p71 = scmp.ne.s32.totalorder %s59, %s60
      %p72 = scmp.eq.s32.totalorder %s22, 1
      %p73 = por %p71, %p72
      %p75 = scmp.ne.s32.totalorder %s60, %s74
      %p76 = scmp.eq.s32.totalorder %s22, 0
      %p77 = por %p75, %p76
      %s79 = sadd.s32 %s78, 1
      %p82 = scmp.eq.s32.totalorder %s16, 1
      %p83 = scmp.ne.s32.totalorder %s78, %s80
      %p84 = scmp.eq.s32.totalorder %s16, 0
      %p85 = por %p83, %p84
      %p86 = scmp.ne.s32.totalorder %s78, %s80
      %p87 = scmp.eq.s32.totalorder %s21, 1
      %p88 = por %p86, %p87
      %p89 = scmp.ne.s32.totalorder %s80, %s81
      %p90 = scmp.eq.s32.totalorder %s21, 0
      %p91 = por %p89, %p90
      %p92 = scmp.ne.s32.totalorder %s80, %s81
      %p93 = scmp.eq.s32.totalorder %s22, 1
      %p94 = por %p92, %p93
      %p96 = scmp.ne.s32.totalorder %s81, %s95
      %p97 = scmp.eq.s32.totalorder %s22, 0
      %p98 = por %p96, %p97
      %s99 = ssub.s32 %s23, %s35
      %s100 = ssub.s32 %s24, %s31
      %s101 = sor.u32 %s99, %s100
      %p102 = scmp.eq.s32.totalorder %s101, 0
      %s104 = sadd.s32 %s103, 1
      %s105 = scalar_select %p102, %s103, %s104
      %p108 = pneg %p102
      %p109 = scmp.eq.s32.totalorder %s16, 1
      %p110 = por %p108, %p109
      %p111 = scmp.ne.s32.totalorder %s103, %s106
      %p112 = scmp.eq.s32.totalorder %s16, 0
      %p113 = por %p111, %p112
      %p114 = scmp.ne.s32.totalorder %s103, %s106
      %p115 = scmp.eq.s32.totalorder %s21, 1
      %p116 = por %p114, %p115
      %p117 = scmp.ne.s32.totalorder %s106, %s107
      %p118 = scmp.eq.s32.totalorder %s21, 0
      %p119 = por %p117, %p118
      %p120 = scmp.ne.s32.totalorder %s106, %s107
      %p121 = scmp.eq.s32.totalorder %s22, 1
      %p122 = por %p120, %p121
      %p124 = scmp.ne.s32.totalorder %s107, %s123
      %p125 = scmp.eq.s32.totalorder %s22, 0
      %p126 = por %p124, %p125
      %s127 = ssub.s32 %s23, %s35
      %s128 = ssub.s32 %s24, %s31
      %s129 = sor.u32 %s127, %s128
      %p130 = scmp.eq.s32.totalorder %s129, 0
      %s132 = sadd.s32 %s131, 1
      %s133 = scalar_select %p130, %s131, %s132
      %p136 = pneg %p130
      %p137 = scmp.eq.s32.totalorder %s16, 1
      %p138 = por %p136, %p137
      %p139 = scmp.ne.s32.totalorder %s131, %s134
      %p140 = scmp.eq.s32.totalorder %s16, 0
      %p141 = por %p139, %p140
      %p142 = scmp.ne.s32.totalorder %s131, %s134
      %p143 = scmp.eq.s32.totalorder %s21, 1
      %p144 = por %p142, %p143
      %p145 = scmp.ne.s32.totalorder %s134, %s135
      %p146 = scmp.eq.s32.totalorder %s21, 0
      %p147 = por %p145, %p146
      %p148 = scmp.ne.s32.totalorder %s134, %s135
      %p149 = scmp.eq.s32.totalorder %s22, 1
      %p150 = por %p148, %p149
      %p152 = scmp.ne.s32.totalorder %s135, %s151
      %p153 = scmp.eq.s32.totalorder %s22, 0
      %p154 = por %p152, %p153
      %s155 = ssub.s32 %s23, %s35
      %s156 = ssub.s32 %s24, %s31
      %s157 = sor.u32 %s155, %s156
      %p158 = scmp.eq.s32.totalorder %s157, 0
      %s160 = sadd.s32 %s159, 1
      %s161 = scalar_select %p158, %s159, %s160
      %p164 = pneg %p158
      %p165 = scmp.eq.s32.totalorder %s16, 1
      %p166 = por %p164, %p165
      %p167 = scmp.ne.s32.totalorder %s159, %s162
      %p168 = scmp.eq.s32.totalorder %s16, 0
      %p169 = por %p167, %p168
      %p170 = scmp.ne.s32.totalorder %s159, %s162
      %p171 = scmp.eq.s32.totalorder %s21, 1
      %p172 = por %p170, %p171
      %p173 = scmp.ne.s32.totalorder %s162, %s163
      %p174 = scmp.eq.s32.totalorder %s21, 0
      %p175 = por %p173, %p174
      %p176 = scmp.ne.s32.totalorder %s162, %s163
      %p177 = scmp.eq.s32.totalorder %s22, 1
      %p178 = por %p176, %p177
      %p180 = scmp.ne.s32.totalorder %s163, %s179
      %p181 = scmp.eq.s32.totalorder %s22, 0
      %p182 = por %p180, %p181
      %s183 = ssub.s32 %s23, %s35
      %s184 = ssub.s32 %s24, %s31
      %s185 = sor.u32 %s183, %s184
      %p186 = scmp.eq.s32.totalorder %s185, 0
      %s188 = sadd.s32 %s187, 1
      %s189 = scalar_select %p186, %s187, %s188
      %p192 = pneg %p186
      %p193 = scmp.eq.s32.totalorder %s16, 1
      %p194 = por %p192, %p193
      %p195 = scmp.ne.s32.totalorder %s187, %s190
      %p196 = scmp.eq.s32.totalorder %s16, 0
      %p197 = por %p195, %p196
      %p198 = scmp.ne.s32.totalorder %s187, %s190
      %p199 = scmp.eq.s32.totalorder %s21, 1
      %p200 = por %p198, %p199
      %p201 = scmp.ne.s32.totalorder %s190, %s191
      %p202 = scmp.eq.s32.totalorder %s21, 0
      %p203 = por %p201, %p202
      %p204 = scmp.ne.s32.totalorder %s190, %s191
      %p205 = scmp.eq.s32.totalorder %s22, 1
      %p206 = por %p204, %p205
      %p208 = scmp.ne.s32.totalorder %s191, %s207
      %p209 = scmp.eq.s32.totalorder %s22, 0
      %p210 = por %p208, %p209
      %p211 = scmp.le.s32.totalorder 1, %s16
      %p212 = scmp.lt.s32.totalorder %s16, 3
      %p213 = pnand %p211, %p212
      %p214 = pneg %p213
      // Predicated region
      $region9: #{multi_scale_embedding.1} parent=5 // pred_check
        _
      $region10: #{multi_scale_embedding.1} parent=5 // pred_check_branch
        %216 = sbr.rel (%p213) target = $region12
      $region11: #{multi_scale_embedding.1} parent=5 // pred_region
        %s217 = ssub.s32 %s16, 1
        // Predicated region
        $region13: #{multi_scale_embedding.1} parent=11 // pred_check
          %p218 = pneg %p49
        $region14: #{multi_scale_embedding.1} parent=11 // pred_check_branch
          %220 = sbr.rel (%p218) target = $region16
        $region15: #{multi_scale_embedding.1} parent=11 // pred_region
          %s222 = ssub.s32 16, 16
          %223 = vsyncadd [#allocation4], %s222
          %s225 = sshll.u32 %s0, 4
          %s226 = int_to_ptr.vmem [resolvable:$true] %s225
          %228 = dma.vmem_to_smem %s226, 16, [#allocation2], [#allocation4]
        $region16: #{multi_scale_embedding.1} parent=11 // pred_fallthru
          _
        // Predicated region
        $region17: #{multi_scale_embedding.1} parent=11 // pred_check
          %p229 = pneg %p70
        $region18: #{multi_scale_embedding.1} parent=11 // pred_check_branch
          %231 = sbr.rel (%p229) target = $region20
        $region19: #{multi_scale_embedding.1} parent=11 // pred_region
          _
        $region20: #{multi_scale_embedding.1} parent=11 // pred_fallthru
          _
        // Predicated region
        $region21: #{multi_scale_embedding.1} parent=11 // pred_check
          %p232 = pneg %p91
        $region22: #{multi_scale_embedding.1} parent=11 // pred_check_branch
          %234 = sbr.rel (%p232) target = $region24
        $region23: #{multi_scale_embedding.1} parent=11 // pred_region
          _
        $region24: #{multi_scale_embedding.1} parent=11 // pred_fallthru
          _
      $region12: #{multi_scale_embedding.1} parent=5 // pred_fallthru
        _
      %p235 = scmp.lt.s32.totalorder %s16, 2
      // Predicated region
      $region25: #{multi_scale_embedding.1} parent=5 // pred_check
        %p236 = pneg %p235
      $region26: #{multi_scale_embedding.1} parent=5 // pred_check_branch
        %238 = sbr.rel (%p236) target = $region28
      $region27: #{multi_scale_embedding.1} parent=5 // pred_region
        // Predicated region
        $region29: #{multi_scale_embedding.1} parent=27 // pred_check
          %p239 = pneg %p113
        $region30: #{multi_scale_embedding.1} parent=27 // pred_check_branch
          %241 = sbr.rel (%p239) target = $region32
        $region31: #{multi_scale_embedding.1} parent=27 // pred_region
          %p242 = scmp.lt.s32.totalorder %s23, 1
          %s243 = scalar_select %p242, %s23, 1
          %p244 = scmp.lt.s32.totalorder %s24, 0
          %s245 = scalar_select %p244, %s24, 0
          %s246 = sadd.s32 %s245, %s243
          %s247 = smul.addr %s246, 4
          %s248 = scalar_lea.vmem %s3, %s247
        $region32: #{multi_scale_embedding.1} parent=27 // pred_fallthru
          _
        // Predicated region
        $region33: #{multi_scale_embedding.1} parent=27 // pred_check
          %p249 = pneg %p141
        $region34: #{multi_scale_embedding.1} parent=27 // pred_check_branch
          %251 = sbr.rel (%p249) target = $region36
        $region35: #{multi_scale_embedding.1} parent=27 // pred_region
          %p252 = scmp.lt.s32.totalorder %s23, 1
          %s253 = scalar_select %p252, %s23, 1
          %p254 = scmp.lt.s32.totalorder %s24, 0
          %s255 = scalar_select %p254, %s24, 0
          %s256 = sadd.s32 %s255, %s253
          %s257 = smul.addr %s256, 4
          %s258 = scalar_lea.vmem %s4, %s257
        $region36: #{multi_scale_embedding.1} parent=27 // pred_fallthru
          _
        // Predicated region
        $region37: #{multi_scale_embedding.1} parent=27 // pred_check
          %p259 = pneg %p169
        $region38: #{multi_scale_embedding.1} parent=27 // pred_check_branch
          %261 = sbr.rel (%p259) target = $region40
        $region39: #{multi_scale_embedding.1} parent=27 // pred_region
          %p262 = scmp.lt.s32.totalorder %s23, 1
          %s263 = scalar_select %p262, %s23, 1
          %p264 = scmp.lt.s32.totalorder %s24, 0
          %s265 = scalar_select %p264, %s24, 0
          %s266 = sadd.s32 %s265, %s263
          %s267 = smul.addr %s266, 4
          %s268 = scalar_lea.vmem %s5, %s267
        $region40: #{multi_scale_embedding.1} parent=27 // pred_fallthru
          _
      $region28: #{multi_scale_embedding.1} parent=5 // pred_fallthru
        _
      %p269 = scmp.le.s32.totalorder 1, %s16
      %p270 = scmp.lt.s32.totalorder %s16, 3
      %p271 = pnand %p269, %p270
      %p272 = pneg %p271
      // Predicated region
      $region41: #{multi_scale_embedding.1} parent=5 // pred_check
        _
      $region42: #{multi_scale_embedding.1} parent=5 // pred_check_branch
        %274 = sbr.rel (%p271) target = $region44
      $region43: #{multi_scale_embedding.1} parent=5 // pred_region
        %s275 = ssub.s32 %s16, 1
        // Predicated region
        $region45: #{multi_scale_embedding.1} parent=43 // pred_check
          %p276 = pneg %p49
        $region46: #{multi_scale_embedding.1} parent=43 // pred_check_branch
          %278 = sbr.rel (%p276) target = $region48
        $region47: #{multi_scale_embedding.1} parent=43 // pred_region
          %279 = dma.done [#allocation4], 16
        $region48: #{multi_scale_embedding.1} parent=43 // pred_fallthru
          _
        %280 = sfence
        %p281 = pneg %p49
        %p282 = pneg %p46
        %p283 = pneg %p70
        %p284 = pneg %p67
        %p285 = pneg %p91
        %p286 = pneg %p88
        %p287 = scmp.lt.s32.totalorder %s25, 1
        %s288 = scalar_select %p287, %s25, 1
        %p289 = scmp.lt.s32.totalorder %s26, 0
        %s290 = scalar_select %p289, %s26, 0
        %s291 = sadd.s32 %s290, %s288
        %s292 = smul.addr %s291, 4
        %s293 = scalar_lea.vmem %s3, %s292
        %p294 = pneg %p119
        %p295 = pneg %p116
        %p296 = scmp.lt.s32.totalorder %s25, 1
        %s297 = scalar_select %p296, %s25, 1
        %p298 = scmp.lt.s32.totalorder %s26, 0
        %s299 = scalar_select %p298, %s26, 0
        %s300 = sadd.s32 %s299, %s297
        %s301 = smul.addr %s300, 4
        %s302 = scalar_lea.vmem %s4, %s301
        %p303 = pneg %p147
        %p304 = pneg %p144
        %p305 = scmp.lt.s32.totalorder %s25, 1
        %s306 = scalar_select %p305, %s25, 1
        %p307 = scmp.lt.s32.totalorder %s26, 0
        %s308 = scalar_select %p307, %s26, 0
        %s309 = sadd.s32 %s308, %s306
        %s310 = smul.addr %s309, 4
        %s311 = scalar_lea.vmem %s5, %s310
        %p312 = pneg %p175
        %p313 = pneg %p172
        %p314 = pneg %p203
        %p315 = pneg %p200
        %s316 = sand.u32 %s190, 1
        %s317 = scalar_lea.sflag [#allocation3], %s316
        %s318 = sand.u32 %s190, 1
        %s319 = smul.addr %s318, 8
        %s320 = scalar_lea.vmem [#allocation5], %s319
        %p321 = scmp.lt.s32.totalorder %s25, 1
        %s322 = scalar_select %p321, %s25, 1
        %p323 = scmp.lt.s32.totalorder %s26, 0
        %s324 = scalar_select %p323, %s26, 0
        %s325 = sadd.s32 %s324, %s322
        %s326 = smul.addr %s325, 4
        %s327 = scalar_lea.vmem %s3, %s326
        %p328 = scmp.lt.s32.totalorder %s25, 1
        %s329 = scalar_select %p328, %s25, 1
        %p330 = scmp.lt.s32.totalorder %s26, 0
        %s331 = scalar_select %p330, %s26, 0
        %s332 = sadd.s32 %s331, %s329
        %s333 = smul.addr %s332, 4
        %s334 = scalar_lea.vmem %s4, %s333
        %p335 = scmp.lt.s32.totalorder %s25, 1
        %s336 = scalar_select %p335, %s25, 1
        %p337 = scmp.lt.s32.totalorder %s26, 0
        %s338 = scalar_select %p337, %s26, 0
        %s339 = sadd.s32 %s338, %s336
        %s340 = smul.addr %s339, 4
        %s341 = scalar_lea.vmem %s5, %s340
        %s342 = sld [smem:[#allocation2]]
        %s343 = sld [smem:[#allocation2 + $0x1]]
        %s344 = sld [smem:[#allocation2 + $0x2]]
        %v345 = vld [vmem:[%s327] sm:$0xf]
        %v346 = vstv %s342
        %v347 = vmul.f32 %v346, %v345
        %v348 = vld [vmem:[%s334] sm:$0xf]
        %v349 = vstv %s343
        %v350 = vmul.f32 %v349, %v348
        %v351 = vadd.f32 %v347, %v350
        %v352 = vld [vmem:[%s341] sm:$0xf]
        %v353 = vstv %s344
        %v354 = vmul.f32 %v353, %v352
        %v355 = vadd.f32 %v351, %v354
        %v356 = vld [vmem:[%s1] sm:$0xff]
        %v357 = vld [vmem:[%s2] sm:$0xff]
        %359 = vset.pattern.permute.xlu0 0
        %360 = vperm.xlu0 %359, %v356
        %v361 = vpop.permute.xlu0 %360
        %v363 = vlaneseq
        %v364 = vshrl.u32 %v363, 7
        %v365 = vsub.s32 0, %v364
        %v366 = vrot.slane %v355, %v365
        %v367 = vmul.f32 %v361, %v366
        %369 = vset.pattern.permute.xlu0 0
        %370 = vperm.xlu0 %369, %v357
        %v371 = vpop.permute.xlu0 %370
        %v373 = vadd.f32 %v371, %v367
        %374 = vset.pattern.permute.xlu0 1
        %375 = vperm.xlu0 %374, %v356
        %v376 = vpop.permute.xlu0 %375
        %v378 = vlaneseq
        %v379 = vshrl.u32 %v378, 7
        %v380 = vsub.s32 1, %v379
        %v381 = vrot.slane %v355, %v380
        %v382 = vmul.f32 %v376, %v381
        %v383 = vadd.f32 %v373, %v382
        %384 = vset.pattern.permute.xlu0 2
        %385 = vperm.xlu0 %384, %v356
        %v386 = vpop.permute.xlu0 %385
        %v388 = vlaneseq
        %v389 = vshrl.u32 %v388, 7
        %v390 = vsub.s32 2, %v389
        %v391 = vrot.slane %v355, %v390
        %v392 = vmul.f32 %v386, %v391
        %v393 = vadd.f32 %v383, %v392
        %394 = vset.pattern.permute.xlu0 3
        %395 = vperm.xlu0 %394, %v356
        %v396 = vpop.permute.xlu0 %395
        %v398 = vlaneseq
        %v399 = vshrl.u32 %v398, 7
        %v400 = vsub.s32 3, %v399
        %v401 = vrot.slane %v355, %v400
        %v402 = vmul.f32 %v396, %v401
        %v403 = vadd.f32 %v393, %v402
        %vm404 = vcmask 523264
        %405 = vst.msk [vmem:[%s320] sm:$0xff] %vm404, %v403
        %s406 = sand.u32 %s190, 1
        %s407 = scalar_lea.sflag [#allocation3], %s406
        %s408 = sand.u32 %s190, 1
        %s409 = smul.addr %s408, 8
        %s410 = scalar_lea.vmem [#allocation5], %s409
        // Predicated region
        $region49: #{multi_scale_embedding.1} parent=43 // pred_check
          %p411 = pneg %p200
        $region50: #{multi_scale_embedding.1} parent=43 // pred_check_branch
          %413 = sbr.rel (%p411) target = $region52
        $region51: #{multi_scale_embedding.1} parent=43 // pred_region
          %s415 = ssub.s32 128, 128
          %416 = vsyncadd %s407, %s415
          %s417 = sadd.s32 %s26, %s25
          %s418 = smul.addr %s417, 128
          %s419 = scalar_lea.hbm %s6, %s418
          %s421 = sshll.u32 %s410, 4
          %s422 = int_to_ptr.vmem [resolvable:$true] %s421
          %424 = dma.vmem_to_hbm [thread:$0]  %s422, 128, %s419, %s407
        $region52: #{multi_scale_embedding.1} parent=43 // pred_fallthru
          _
      $region44: #{multi_scale_embedding.1} parent=5 // pred_fallthru
        _
      %p425 = scmp.le.s32.totalorder 2, %s16
      // Predicated region
      $region53: #{multi_scale_embedding.1} parent=5 // pred_check
        %p426 = pneg %p425
      $region54: #{multi_scale_embedding.1} parent=5 // pred_check_branch
        %428 = sbr.rel (%p426) target = $region56
      $region55: #{multi_scale_embedding.1} parent=5 // pred_region
        %s429 = ssub.s32 %s16, 2
        // Predicated region
        $region57: #{multi_scale_embedding.1} parent=55 // pred_check
          %p430 = pneg %p206
        $region58: #{multi_scale_embedding.1} parent=55 // pred_check_branch
          %432 = sbr.rel (%p430) target = $region60
        $region59: #{multi_scale_embedding.1} parent=55 // pred_region
          %s433 = sand.u32 %s191, 1
          %s434 = scalar_lea.sflag [#allocation3], %s433
          %s435 = sand.u32 %s191, 1
          %s436 = smul.addr %s435, 8
          %s437 = scalar_lea.vmem [#allocation5], %s436
          %438 = dma.done %s434, 128
        $region60: #{multi_scale_embedding.1} parent=55 // pred_fallthru
          _
      $region56: #{multi_scale_embedding.1} parent=5 // pred_fallthru
        _
    $region6: #{multi_scale_embedding.1} parent=1 // loop_footer
      %s20 = sadd.s32 1, %s16
    $region7: #{multi_scale_embedding.1} parent=1 // loop_footer_branch
      %15 = sbr.rel target = $region3
    $region8: #{multi_scale_embedding.1} parent=1 // loop_exit
      _
    %439 = vsyncpa [#allocation3], 1
    %s440 = scalar_lea.sflag [#allocation3], 1
    %441 = vsyncpa %s440, 1
    %442 = vsyncpa [#allocation4], 1
    %s443 = scalar_lea.sflag [#allocation4], 1
    %444 = vsyncpa %s443, 1

</llo_original>
